<compile_context>
chip_gen: v7x
topology: tpu7x:2x2x1
jax: 0.10.0
libtpu: 0.0.40
codegen_flags: <defaults>
</compile_context>

<pallas_src>
import functools

import jax
import jax.numpy as jnp
from jax.experimental import pallas as pl
from jax.experimental.pallas import tpu as pltpu


def _lm_head_kernel(x_ref, wd_ref, bd_ref, g_ref, beta_ref, wv_ref, o_ref,
                    z_ref, *, eps):
    # x_ref   : (tm, H)      tile of gathered hidden rows (input dtype)
    # wd_ref  : (H, H)       dense weight, pre-transposed to (in, out)
    # bd_ref  : (1, H)       dense bias
    # g_ref   : (1, H)       LayerNorm gamma
    # beta_ref: (1, H)       LayerNorm beta
    # wv_ref  : (H, tv)      decoder weight tile, pre-transposed to (in, out)
    # o_ref   : (tm, tv)     output logits tile
    # z_ref   : (tm, H)      VMEM scratch holding LayerNorm output for this row tile

    # dense + LayerNorm only once per row tile (vocab axis is the inner grid axis).
    @pl.when(pl.program_id(1) == 0)
    def _():
        # Feed MXU in the input dtype; accumulate in f32.
        y = jnp.dot(x_ref[...], wd_ref[...], preferred_element_type=jnp.float32)
        y = y + bd_ref[...].astype(jnp.float32)

        # LayerNorm over the hidden axis, f32 math (biased variance, as torch).
        mean = jnp.mean(y, axis=-1, keepdims=True)
        centered = y - mean
        var = jnp.mean(centered * centered, axis=-1, keepdims=True)
        z = centered * jax.lax.rsqrt(var + eps)
        z = z * g_ref[...].astype(jnp.float32) + beta_ref[...].astype(jnp.float32)
        z_ref[...] = z.astype(z_ref.dtype)

    # Decoder projection for this vocab tile (MXU, f32 accumulation).
    o_ref[...] = jnp.dot(z_ref[...], wv_ref[...],
                         preferred_element_type=jnp.float32).astype(o_ref.dtype)


def _round_up(x, m):
    return ((x + m - 1) // m) * m


def _pick_vocab_tile(v, preferred=512):
    # Largest tile <= preferred that divides V and is a multiple of 128;
    # otherwise use the full vocab dim (allowed: block dim == full array dim).
    if v % 128 == 0:
        for cand in (preferred, 256, 128):
            if cand <= v and v % cand == 0:
                return cand
    return v


def roberta_lm_head(hidden_states, masked_token_indexes,
                    dense_weight, dense_bias, ln_weight, ln_bias,
                    decoder_weight, *, eps=1e-12, row_tile=256):
    """RobertaLMHead forward.

    hidden_states        : (B, S, H)
    masked_token_indexes : (M,) int32 indices into the flattened (B*S) rows, or None
    dense_weight         : (H, H)   PyTorch (out, in) layout
    dense_bias           : (H,)
    ln_weight, ln_bias   : (H,)
    decoder_weight       : (V, H)   tied embedding weights, PyTorch (out, in) layout
    returns              : (M, V) logits  (or (B*S, V) if masked_token_indexes is None)
    """
    B, S, H = hidden_states.shape
    V = decoder_weight.shape[0]
    dtype = hidden_states.dtype

    # Row gather (index_select) done in the wrapper — one cheap XLA op.
    flat = hidden_states.reshape(B * S, H)
    if masked_token_indexes is not None:
        rows = jnp.take(flat, masked_token_indexes, axis=0)
    else:
        rows = flat
    M = rows.shape[0]

    # Adaptive tile sizes.  Sublane granularity: 8 for 4-byte, 16 for 2-byte dtypes.
    sub = 8 if jnp.dtype(dtype).itemsize >= 4 else 16
    tm = max(sub, min(row_tile, _round_up(M, sub)))
    tm = _round_up(tm, sub)
    padded_m = _round_up(M, tm)
    if padded_m != M:
        rows = jnp.pad(rows, ((0, padded_m - M), (0, 0)))
    tv = _pick_vocab_tile(V)

    # One-time weight pre-transposes to (in, out) so the kernel never transposes.
    wd_t = jnp.asarray(dense_weight, dtype=dtype).T          # (H, H)
    wv_t = jnp.asarray(decoder_weight, dtype=dtype).T        # (H, V)
    bd2 = dense_bias.reshape(1, H)
    g2 = ln_weight.reshape(1, H)
    be2 = ln_bias.reshape(1, H)

    in_bytes = jnp.dtype(dtype).itemsize
    out_bytes = jnp.dtype(dtype).itemsize

    # VMEM budget: double-buffered streamed operands + resident weight + scratch.
    vmem_est = (2 * tm * H * in_bytes          # x tiles
                + 2 * H * H * in_bytes         # dense weight
                + 2 * H * tv * in_bytes        # decoder weight tiles
                + 2 * tm * tv * out_bytes      # output tiles
                + tm * H * 4                   # f32/LN scratch
                + 8 * H * 4)                   # biases / gamma / beta
    vmem_limit = int(min(max(int(1.5 * vmem_est), 4 << 20), 100 << 20))

    cost = pl.CostEstimate(
        flops=2 * padded_m * H * H + 2 * padded_m * H * V + 10 * padded_m * H,
        transcendentals=padded_m,
        bytes_accessed=(padded_m * H * in_bytes + H * H * in_bytes
                        + H * V * in_bytes + padded_m * V * out_bytes),
    )

    kernel = functools.partial(_lm_head_kernel, eps=eps)

    grid = (padded_m // tm, V // tv)
    out = pl.pallas_call(
        kernel,
        out_shape=jax.ShapeDtypeStruct((padded_m, V), dtype),
        grid_spec=pltpu.PrefetchScalarGridSpec(
            num_scalar_prefetch=0,
            grid=grid,
            in_specs=[
                pl.BlockSpec((tm, H), lambda i, j: (i, 0)),   # gathered rows
                pl.BlockSpec((H, H), lambda i, j: (0, 0)),    # dense weight (in,out)
                pl.BlockSpec((1, H), lambda i, j: (0, 0)),    # dense bias
                pl.BlockSpec((1, H), lambda i, j: (0, 0)),    # LN gamma
                pl.BlockSpec((1, H), lambda i, j: (0, 0)),    # LN beta
                pl.BlockSpec((H, tv), lambda i, j: (0, j)),   # decoder weight tile
            ],
            out_specs=pl.BlockSpec((tm, tv), lambda i, j: (i, j)),
            scratch_shapes=[pltpu.VMEM((tm, H), dtype)],      # LN output cache
        ),
        compiler_params=pltpu.CompilerParams(
            dimension_semantics=("parallel", "arbitrary"),
            vmem_limit_bytes=vmem_limit,
        ),
        cost_estimate=cost,
    )(rows, wd_t, bd2, g2, be2, wv_t)

    return out[:M]


if __name__ == "__main__":
    # Small config: batch=2, seq=8, hidden=32, vocab=64, layer_norm_eps=1e-12.
    B, S, H, V = 2, 8, 32, 64
    eps = 1e-12

    key = jax.random.PRNGKey(0)
    k_hs, k_wd, k_bd, k_g, k_be, k_dec = jax.random.split(key, 6)

    hidden_states = jax.random.normal(k_hs, (B, S, H), dtype=jnp.float32)
    masked_token_indexes = jnp.array([1, 3, 7, 9, 12, 15], dtype=jnp.int32)

    dense_weight = jax.random.normal(k_wd, (H, H), dtype=jnp.float32) * 0.02   # (out, in)
    dense_bias = jax.random.normal(k_bd, (H,), dtype=jnp.float32) * 0.02
    ln_weight = jnp.ones((H,), dtype=jnp.float32) + 0.1 * jax.random.normal(k_g, (H,))
    ln_bias = 0.1 * jax.random.normal(k_be, (H,), dtype=jnp.float32)
    decoder_weight = jax.random.normal(k_dec, (V, H), dtype=jnp.float32) * 0.02  # tied emb (V, H)

    out = roberta_lm_head(hidden_states, masked_token_indexes,
                          dense_weight, dense_bias, ln_weight, ln_bias,
                          decoder_weight, eps=eps)
    out = jax.block_until_ready(out)
    assert out.shape == (masked_token_indexes.shape[0], V)

    # Pure-JAX reference (mirrors the PyTorch forward, sparse_predict path).
    g_rows = hidden_states.reshape(-1, H)[masked_token_indexes]
    y = g_rows @ dense_weight.T + dense_bias
    mu = jnp.mean(y, axis=-1, keepdims=True)
    var = jnp.mean((y - mu) ** 2, axis=-1, keepdims=True)
    z = (y - mu) / jnp.sqrt(var + eps) * ln_weight + ln_bias
    ref = z @ decoder_weight.T

    assert jnp.allclose(out, ref, atol=2e-3, rtol=2e-3), "mismatch vs reference"

    # TODO(synk): training-mode niceties (e.g. fusing the row gather into the kernel
    # via PrefetchScalarGridSpec + pl.Element index maps) are left to the wrapper.
    print("KERNEL_OK")
</pallas_src>

<mosaic_0001>
module attributes {stable_mosaic.version = 11 : i64} {
  func.func @_lm_head_kernel(%arg0: i32, %arg1: i32, %arg2: memref<8x32xf32, #tpu.memory_space<vmem>>, %arg3: memref<32x32xf32, #tpu.memory_space<vmem>>, %arg4: memref<1x32xf32, #tpu.memory_space<vmem>>, %arg5: memref<1x32xf32, #tpu.memory_space<vmem>>, %arg6: memref<1x32xf32, #tpu.memory_space<vmem>>, %arg7: memref<32x64xf32, #tpu.memory_space<vmem>>, %arg8: memref<8x64xf32, #tpu.memory_space<vmem>>, %arg9: memref<8x32xf32, #tpu.memory_space<vmem>>) attributes {dimension_semantics = [#tpu.dimension_semantics<parallel>, #tpu.dimension_semantics<arbitrary>], iteration_bounds = array<i64: 1, 1>, scalar_prefetch = 0 : i64, scratch_operands = 1 : i64, tpu.core_type = #tpu.core_type<tc>, window_params = [{transform_indices = @transform_0, window_bounds = array<i64: 8, 32>}, {pipeline_mode = #tpu.pipeline_mode<synchronous>, transform_indices = @transform_1, window_bounds = array<i64: 32, 32>}, {pipeline_mode = #tpu.pipeline_mode<synchronous>, transform_indices = @transform_2, window_bounds = array<i64: 1, 32>}, {pipeline_mode = #tpu.pipeline_mode<synchronous>, transform_indices = @transform_3, window_bounds = array<i64: 1, 32>}, {pipeline_mode = #tpu.pipeline_mode<synchronous>, transform_indices = @transform_4, window_bounds = array<i64: 1, 32>}, {transform_indices = @transform_5, window_bounds = array<i64: 32, 64>}, {transform_indices = @transform_6, window_bounds = array<i64: 8, 64>}]} {
    %c0_i32 = arith.constant 0 : i32
    %0 = arith.cmpi eq, %arg1, %c0_i32 : i32
    %1 = arith.extui %0 : i1 to i32
    %c0_i32_0 = arith.constant 0 : i32
    %2 = arith.cmpi ne, %1, %c0_i32_0 : i32
    scf.if %2 {
      %c0_6 = arith.constant 0 : index
      %c0_7 = arith.constant 0 : index
      %7 = vector.load %arg2[%c0_6, %c0_7] : memref<8x32xf32, #tpu.memory_space<vmem>>, vector<8x32xf32>
      %c0_8 = arith.constant 0 : index
      %c0_9 = arith.constant 0 : index
      %8 = vector.load %arg3[%c0_8, %c0_9] : memref<32x32xf32, #tpu.memory_space<vmem>>, vector<32x32xf32>
      %cst_10 = arith.constant dense<0.000000e+00> : vector<8x32xf32>
      %9 = tpu.matmul %7, %8, %cst_10 {dimension_numbers = #tpu.dot_dimension_numbers<[1], [0], [0], [1], [0, 0, 1, 1], [], []>} : vector<8x32xf32>, vector<32x32xf32>, vector<8x32xf32> -> vector<8x32xf32>
      %c0_11 = arith.constant 0 : index
      %c0_12 = arith.constant 0 : index
      %10 = vector.load %arg4[%c0_11, %c0_12] : memref<1x32xf32, #tpu.memory_space<vmem>>, vector<1x32xf32>
      %11 = vector.broadcast %10 : vector<1x32xf32> to vector<8x32xf32>
      %12 = arith.addf %9, %11 : vector<8x32xf32>
      %cst_13 = arith.constant dense<0.000000e+00> : vector<8xf32>
      %13 = vector.multi_reduction <add>, %12, %cst_13 [1] : vector<8x32xf32> to vector<8xf32>
      %14 = vector.shape_cast %13 : vector<8xf32> to vector<8x1xf32>
      %cst_14 = arith.constant 3.200000e+01 : f32
      %15 = vector.broadcast %cst_14 : f32 to vector<8x1xf32>
      %16 = arith.divf %14, %15 : vector<8x1xf32>
      %17 = vector.broadcast %16 : vector<8x1xf32> to vector<8x32xf32>
      %18 = arith.subf %12, %17 : vector<8x32xf32>
      %19 = arith.mulf %18, %18 : vector<8x32xf32>
      %cst_15 = arith.constant dense<0.000000e+00> : vector<8xf32>
      %20 = vector.multi_reduction <add>, %19, %cst_15 [1] : vector<8x32xf32> to vector<8xf32>
      %21 = vector.shape_cast %20 : vector<8xf32> to vector<8x1xf32>
      %cst_16 = arith.constant 3.200000e+01 : f32
      %22 = vector.broadcast %cst_16 : f32 to vector<8x1xf32>
      %23 = arith.divf %21, %22 : vector<8x1xf32>
      %cst_17 = arith.constant 9.99999996E-13 : f32
      %24 = vector.broadcast %cst_17 : f32 to vector<8x1xf32>
      %25 = arith.addf %23, %24 : vector<8x1xf32>
      %26 = math.rsqrt %25 : vector<8x1xf32>
      %27 = vector.broadcast %26 : vector<8x1xf32> to vector<8x32xf32>
      %28 = arith.mulf %18, %27 : vector<8x32xf32>
      %c0_18 = arith.constant 0 : index
      %c0_19 = arith.constant 0 : index
      %29 = vector.load %arg5[%c0_18, %c0_19] : memref<1x32xf32, #tpu.memory_space<vmem>>, vector<1x32xf32>
      %30 = vector.broadcast %29 : vector<1x32xf32> to vector<8x32xf32>
      %31 = arith.mulf %28, %30 : vector<8x32xf32>
      %c0_20 = arith.constant 0 : index
      %c0_21 = arith.constant 0 : index
      %32 = vector.load %arg6[%c0_20, %c0_21] : memref<1x32xf32, #tpu.memory_space<vmem>>, vector<1x32xf32>
      %33 = vector.broadcast %32 : vector<1x32xf32> to vector<8x32xf32>
      %34 = arith.addf %31, %33 : vector<8x32xf32>
      %c0_22 = arith.constant 0 : index
      %c0_23 = arith.constant 0 : index
      %35 = vector.load %arg9[%c0_22, %c0_23] : memref<8x32xf32, #tpu.memory_space<vmem>>, vector<8x32xf32>
      tpu.vector_store %arg9[%c0_22, %c0_23], %34 {strides = array<i32>} : memref<8x32xf32, #tpu.memory_space<vmem>>, vector<8x32xf32>,
    } else {
    }
    %c0 = arith.constant 0 : index
    %c0_1 = arith.constant 0 : index
    %3 = vector.load %arg9[%c0, %c0_1] : memref<8x32xf32, #tpu.memory_space<vmem>>, vector<8x32xf32>
    %c0_2 = arith.constant 0 : index
    %c0_3 = arith.constant 0 : index
    %4 = vector.load %arg7[%c0_2, %c0_3] : memref<32x64xf32, #tpu.memory_space<vmem>>, vector<32x64xf32>
    %cst = arith.constant dense<0.000000e+00> : vector<8x64xf32>
    %5 = tpu.matmul %3, %4, %cst {dimension_numbers = #tpu.dot_dimension_numbers<[1], [0], [0], [1], [0, 0, 1, 1], [], []>} : vector<8x32xf32>, vector<32x64xf32>, vector<8x64xf32> -> vector<8x64xf32>
    %c0_4 = arith.constant 0 : index
    %c0_5 = arith.constant 0 : index
    %6 = vector.load %arg8[%c0_4, %c0_5] : memref<8x64xf32, #tpu.memory_space<vmem>>, vector<8x64xf32>
    tpu.vector_store %arg8[%c0_4, %c0_5], %5 {strides = array<i32>} : memref<8x64xf32, #tpu.memory_space<vmem>>, vector<8x64xf32>,
    return
  }
  func.func @transform_0(%arg0: i32, %arg1: i32) -> (i32, i32) {
    %c0_i32 = arith.constant 0 : i32
    %c0_i32_0 = arith.constant 0 : i32
    return %arg0, %c0_i32 : i32, i32
  }
  func.func @transform_1(%arg0: i32, %arg1: i32) -> (i32, i32) {
    %c0_i32 = arith.constant 0 : i32
    %c0_i32_0 = arith.constant 0 : i32
    %c0_i32_1 = arith.constant 0 : i32
    return %c0_i32, %c0_i32_0 : i32, i32
  }
  func.func @transform_2(%arg0: i32, %arg1: i32) -> (i32, i32) {
    %c0_i32 = arith.constant 0 : i32
    %c0_i32_0 = arith.constant 0 : i32
    %c0_i32_1 = arith.constant 0 : i32
    return %c0_i32, %c0_i32_0 : i32, i32
  }
  func.func @transform_3(%arg0: i32, %arg1: i32) -> (i32, i32) {
    %c0_i32 = arith.constant 0 : i32
    %c0_i32_0 = arith.constant 0 : i32
    %c0_i32_1 = arith.constant 0 : i32
    return %c0_i32, %c0_i32_0 : i32, i32
  }
  func.func @transform_4(%arg0: i32, %arg1: i32) -> (i32, i32) {
    %c0_i32 = arith.constant 0 : i32
    %c0_i32_0 = arith.constant 0 : i32
    %c0_i32_1 = arith.constant 0 : i32
    return %c0_i32, %c0_i32_0 : i32, i32
  }
  func.func @transform_5(%arg0: i32, %arg1: i32) -> (i32, i32) {
    %c0_i32 = arith.constant 0 : i32
    %c0_i32_0 = arith.constant 0 : i32
    return %c0_i32, %arg1 : i32, i32
  }
  func.func @transform_6(%arg0: i32, %arg1: i32) -> (i32, i32) {
    %c0_i32 = arith.constant 0 : i32
    return %arg0, %arg1 : i32, i32
  }
}

</mosaic_0001>

<llo_original>
// kernel: tpu_custom_call.1
$region0: #{tpu_custom_call.1}
  #allocation0 [shape = 'u32[]', space=smem, size = 0x4, offset = 0x4, fixed_abs, tag = 'smem constant byte address 0x4 - core index']
  #allocation1 [shape = 'u32[144,128]{1,0:T(1,128)}', space=vmem, size = 0x12000, scoped, tag = 'internal scratch']
  #allocation2 [shape = 'f32[8,32]{1,0:T(8,128)}', space=vmem, size = 0x1000, scoped, tag = 'scratch operand']
  %s0 = inlined_call_operand.hbm [shape: f32[8,32], index: 0, kind: input, shape index: {}]
  %s1 = inlined_call_operand.hbm [shape: f32[32,32], index: 1, kind: input, shape index: {}]
  %s2 = inlined_call_operand.vmem [shape: f32[1,32], index: 2, kind: input, shape index: {}]
  %s3 = inlined_call_operand.vmem [shape: f32[1,32], index: 3, kind: input, shape index: {}]
  %s4 = inlined_call_operand.vmem [shape: f32[1,32], index: 4, kind: input, shape index: {}]
  %s5 = inlined_call_operand.hbm [shape: f32[32,64], index: 5, kind: input, shape index: {}]
  %s6 = inlined_call_operand.hbm [shape: f32[8,64], index: 6, kind: output, shape index: {}]
  %s7 = sld [smem:[#allocation0]]
  $region50: #{tpu_custom_call.1} parent=0
    _
  %s9 = ssub.s32 1, %s7
  %s10 = scalar_select 0, %s9, %s7
  $region1: #{tpu_custom_call.1} parent=0
    #allocation3 [shape = 'u8[4096]{0}', space=vmem, size = 0x1000, scoped, tag = 'input window, operand 0, single buffered']
    #allocation4 [shape = 's32[1]{0}', space=sflag, size = 0x4, scoped, tag = 'scoped memory for tpu_custom_call.1']
    #allocation5 [shape = 's32[1]{0}', space=sflag, size = 0x4, scoped, tag = 'scoped memory for tpu_custom_call.1']
    #allocation6 [shape = 'u8[16384]{0}', space=vmem, size = 0x4000, scoped, tag = 'input window, operand 1, single buffered']
    #allocation7 [shape = 's32[1]{0}', space=sflag, size = 0x4, scoped, tag = 'scoped memory for tpu_custom_call.1']
    #allocation8 [shape = 'u8[16384]{0}', space=vmem, size = 0x4000, scoped, tag = 'input window, operand 5, single buffered']
    #allocation9 [shape = 'u8[4096]{0}', space=vmem, size = 0x1000, scoped, tag = 'output window, operand 0, single buffered']
    %11 = vsyncpa [#allocation4], 0
    %12 = vsyncpa [#allocation7], 0
    %13 = vsyncpa [#allocation5], 0
    // Predicated region
    $region2: #{tpu_custom_call.1} parent=1 // pred_check
      _
    $region3: #{tpu_custom_call.1} parent=1 // pred_check_branch
      %15 = sbr.rel (0) target = $region5
    $region4: #{tpu_custom_call.1} parent=1 // pred_region
      %s17 = ssub.s32 128, 128
      %18 = vsyncadd [#allocation4], %s17
      %s20 = sshll.u32 [#allocation3], 4
      %s21 = int_to_ptr.vmem [resolvable:$true] %s20
      %23 = dma.hbm_to_vmem [thread:$0]  %s0, 128, %s21, [#allocation4]
    $region5: #{tpu_custom_call.1} parent=1 // pred_fallthru
      _
    // Predicated region
    $region6: #{tpu_custom_call.1} parent=1 // pred_check
      _
    $region7: #{tpu_custom_call.1} parent=1 // pred_check_branch
      %25 = sbr.rel (0) target = $region9
    $region8: #{tpu_custom_call.1} parent=1 // pred_region
      %s27 = ssub.s32 512, 512
      %28 = vsyncadd [#allocation7], %s27
      %s29 = sshll.u32 [#allocation6], 4
      %s30 = int_to_ptr.vmem [resolvable:$true] %s29
      %35 = dma.hbm_to_vmem [thread:$0]  %s1, 512, %s30, [#allocation7], 128, 128, 8
    $region9: #{tpu_custom_call.1} parent=1 // pred_fallthru
      _
    // Predicated region
    $region10: #{tpu_custom_call.1} parent=1 // pred_check
      _
    $region11: #{tpu_custom_call.1} parent=1 // pred_check_branch
      %37 = sbr.rel (0) target = $region13
    $region12: #{tpu_custom_call.1} parent=1 // pred_region
      _
    $region13: #{tpu_custom_call.1} parent=1 // pred_fallthru
      _
    // Predicated region
    $region14: #{tpu_custom_call.1} parent=1 // pred_check
      _
    $region15: #{tpu_custom_call.1} parent=1 // pred_check_branch
      %39 = sbr.rel (0) target = $region17
    $region16: #{tpu_custom_call.1} parent=1 // pred_region
      _
    $region17: #{tpu_custom_call.1} parent=1 // pred_fallthru
      _
    // Predicated region
    $region18: #{tpu_custom_call.1} parent=1 // pred_check
      _
    $region19: #{tpu_custom_call.1} parent=1 // pred_check_branch
      %41 = sbr.rel (0) target = $region21
    $region20: #{tpu_custom_call.1} parent=1 // pred_region
      _
    $region21: #{tpu_custom_call.1} parent=1 // pred_fallthru
      _
    // Predicated region
    $region22: #{tpu_custom_call.1} parent=1 // pred_check
      _
    $region23: #{tpu_custom_call.1} parent=1 // pred_check_branch
      %43 = sbr.rel (0) target = $region25
    $region24: #{tpu_custom_call.1} parent=1 // pred_region
      %s45 = ssub.s32 512, 512
      %46 = vsyncadd [#allocation7], %s45
      %s47 = sshll.u32 [#allocation8], 4
      %s48 = int_to_ptr.vmem [resolvable:$true] %s47
      %53 = dma.hbm_to_vmem [thread:$0]  %s5, 512, %s48, [#allocation7], 128, 128, 8
    $region25: #{tpu_custom_call.1} parent=1 // pred_fallthru
      _
    // Predicated region
    $region26: #{tpu_custom_call.1} parent=1 // pred_check
      _
    $region27: #{tpu_custom_call.1} parent=1 // pred_check_branch
      %55 = sbr.rel (0) target = $region29
    $region28: #{tpu_custom_call.1} parent=1 // pred_region
      %56 = dma.done [#allocation4], 128
    $region29: #{tpu_custom_call.1} parent=1 // pred_fallthru
      _
    // Predicated region
    $region30: #{tpu_custom_call.1} parent=1 // pred_check
      _
    $region31: #{tpu_custom_call.1} parent=1 // pred_check_branch
      %58 = sbr.rel (0) target = $region33
    $region32: #{tpu_custom_call.1} parent=1 // pred_region
      %59 = dma.done [#allocation7], 512
    $region33: #{tpu_custom_call.1} parent=1 // pred_fallthru
      _
    // Predicated region
    $region34: #{tpu_custom_call.1} parent=1 // pred_check
      _
    $region35: #{tpu_custom_call.1} parent=1 // pred_check_branch
      %61 = sbr.rel (0) target = $region37
    $region36: #{tpu_custom_call.1} parent=1 // pred_region
      %62 = dma.done [#allocation7], 512
    $region37: #{tpu_custom_call.1} parent=1 // pred_fallthru
      _
    %p63 = scmp.eq.s32.totalorder 0, 0
    // Predicated region
    $region38: #{tpu_custom_call.1} parent=1 // pred_check
      %p64 = pneg %p63
    $region39: #{tpu_custom_call.1} parent=1 // pred_check_branch
      %66 = sbr.rel (%p64) target = $region41
    $region40: #{tpu_custom_call.1} parent=1 // pred_region
      %v67 = vld [vmem:[#allocation3] sm:$0xff]
      %v68 = vld [vmem:[#allocation6] sm:$0xff]
      %v69 = vld [vmem:[#allocation6 + $0x8] sm:$0xff]
      %v70 = vld [vmem:[#allocation6 + $0x10] sm:$0xff]
      %v71 = vld [vmem:[#allocation6 + $0x18] sm:$0xff]
      %v72 = vld [vmem:[%s2] sm:$0x1]
      %v74 = vlaneseq
      %v75 = vshrl.u32 %v74, 7
      %v76 = vsub.s32 0, %v75
      %v77 = vrot.slane %v72, %v76
      %vm79 = vcmask 261120
      %v81 = vsel %vm79, %v67, 0
      %83 = vmatprep.subr.mxu0 0.0
      %84 = vmatpush1.msra.mxu0 %v68
      %85 = vmatprep.subr.mxu0 0.0
      %86 = vmatpush1.msra.mxu0 %v69
      %87 = vmatprep.subr.mxu0 0.0
      %88 = vmatpush1.msra.mxu0 %v70
      %89 = vmatprep.subr.mxu0 0.0
      %90 = vmatpush1.msra.mxu0 %v71
      %91 = vmatprep.subr.mxu0 0.0
      %92 = vmatpush1.msra.mxu0 0.0
      %93 = vmatprep.subr.mxu0 0.0
      %94 = vmatpush1.msra.mxu0 0.0
      %95 = vmatprep.subr.mxu0 0.0
      %96 = vmatpush1.msra.mxu0 0.0
      %97 = vmatprep.subr.mxu0 0.0
      %98 = vmatpush1.msra.mxu0 0.0
      %99 = vmatprep.subr.mxu0 0.0
      %100 = vmatpush1.msra.mxu0 0.0
      %101 = vmatprep.subr.mxu0 0.0
      %102 = vmatpush1.msra.mxu0 0.0
      %103 = vmatprep.subr.mxu0 0.0
      %104 = vmatpush1.msra.mxu0 0.0
      %105 = vmatprep.subr.mxu0 0.0
      %106 = vmatpush1.msra.mxu0 0.0
      %107 = vmatprep.subr.mxu0 0.0
      %108 = vmatpush1.msra.mxu0 0.0
      %109 = vmatprep.subr.mxu0 0.0
      %110 = vmatpush1.msra.mxu0 0.0
      %111 = vmatprep.subr.mxu0 0.0
      %112 = vmatpush1.msra.mxu0 0.0
      %113 = vmatprep.subr.mxu0 0.0
      %114 = vmatpush1.msra.mxu0 0.0
      %115 = vmatprep.subr.mxu0 0.0
      %116 = vmatpush1.msra.mxu0 0.0
      %117 = vmatprep.subr.mxu0 0.0
      %118 = vmatpush1.msra.mxu0 0.0
      %119 = vmatprep.subr.mxu0 0.0
      %120 = vmatpush1.msra.mxu0 0.0
      %121 = vmatprep.subr.mxu0 0.0
      %122 = vmatpush1.msra.mxu0 0.0
      %123 = vmatprep.subr.mxu0 0.0
      %124 = vmatpush1.msra.mxu0 0.0
      %125 = vmatprep.subr.mxu0 0.0
      %126 = vmatpush1.msra.mxu0 0.0
      %127 = vmatprep.subr.mxu0 0.0
      %128 = vmatpush1.msra.mxu0 0.0
      %129 = vmatprep.subr.mxu0 0.0
      %130 = vmatpush1.msra.mxu0 0.0
      %131 = vmatprep.subr.mxu0 0.0
      %132 = vmatpush1.msra.mxu0 0.0
      %133 = vmatprep.subr.mxu0 0.0
      %134 = vmatpush1.msra.mxu0 0.0
      %135 = vmatprep.subr.mxu0 0.0
      %136 = vmatpush1.msra.mxu0 0.0
      %137 = vmatprep.subr.mxu0 0.0
      %138 = vmatpush1.msra.mxu0 0.0
      %139 = vmatprep.subr.mxu0 0.0
      %140 = vmatpush1.msra.mxu0 0.0
      %141 = vmatprep.subr.mxu0 0.0
      %142 = vmatpush1.msra.mxu0 0.0
      %143 = vmatprep.subr.mxu0 0.0
      %144 = vmatpush1.msra.mxu0 0.0
      %145 = vmatprep.subr.mxu0 0.0
      %146 = vmatpush1.msra.mxu0 0.0
      %147 = vmatprep.mubr.f32.mxu0 0.0
      %148 = vmatmul.mubr.f32.gmra.mrb[0].mxu0 %v81
      %v149 = vpop.f32.mrb[0].mxu0
      %v150 = vadd.f32 %v77, %v149
      %v151 = vpop.f32.mrb[0].mxu0
      %152 = vdwg.mxu0
      %v153 = vsel %vm79, %v150, 0.0
      %154 = vadd.xlane.f32.xlu0 %v153
      %v155 = vpop.xlane.xlu0 %154
      %v156 = vrcp.pop 32.0
      %v157 = vmul.f32 %v155, %v156
      %v158 = vsub.f32 %v150, %v157
      %v159 = vmul.f32 %v158, %v158
      %v160 = vsel %vm79, %v159, 0.0
      %161 = vadd.xlane.f32.xlu0 %v160
      %v162 = vpop.xlane.xlu0 %161
      %v163 = vmul.f32 %v162, %v156
      %v164 = vadd.f32 %v163, 1e-12
      %v165 = vrsqrt.pop %v164
      %v166 = vmul.f32 %v158, %v165
      %v167 = vld [vmem:[%s3] sm:$0x1]
      %v169 = vlaneseq
      %v170 = vshrl.u32 %v169, 7
      %v171 = vsub.s32 0, %v170
      %v172 = vrot.slane %v167, %v171
      %v174 = vmul.f32 %v166, %v172
      %v175 = vld [vmem:[%s4] sm:$0x1]
      %v177 = vlaneseq
      %v178 = vshrl.u32 %v177, 7
      %v179 = vsub.s32 0, %v178
      %v180 = vrot.slane %v175, %v179
      %v182 = vadd.f32 %v174, %v180
      %183 = vst.msk [vmem:[#allocation2] sm:$0xff] %vm79, %v182
    $region41: #{tpu_custom_call.1} parent=1 // pred_fallthru
      _
    %v184 = vld [vmem:[#allocation2] sm:$0xff]
    %v185 = vld [vmem:[#allocation8] sm:$0xff]
    %v186 = vld [vmem:[#allocation8 + $0x8] sm:$0xff]
    %v187 = vld [vmem:[#allocation8 + $0x10] sm:$0xff]
    %v188 = vld [vmem:[#allocation8 + $0x18] sm:$0xff]
    %vm189 = vcmask 261120
    %v191 = vsel %vm189, %v184, 0
    %193 = vmatprep.subr.mxu0 0.0
    %194 = vmatpush1.msra.mxu0 %v185
    %195 = vmatprep.subr.mxu0 0.0
    %196 = vmatpush1.msra.mxu0 %v186
    %197 = vmatprep.subr.mxu0 0.0
    %198 = vmatpush1.msra.mxu0 %v187
    %199 = vmatprep.subr.mxu0 0.0
    %200 = vmatpush1.msra.mxu0 %v188
    %201 = vmatprep.subr.mxu0 0.0
    %202 = vmatpush1.msra.mxu0 0.0
    %203 = vmatprep.subr.mxu0 0.0
    %204 = vmatpush1.msra.mxu0 0.0
    %205 = vmatprep.subr.mxu0 0.0
    %206 = vmatpush1.msra.mxu0 0.0
    %207 = vmatprep.subr.mxu0 0.0
    %208 = vmatpush1.msra.mxu0 0.0
    %209 = vmatprep.subr.mxu0 0.0
    %210 = vmatpush1.msra.mxu0 0.0
    %211 = vmatprep.subr.mxu0 0.0
    %212 = vmatpush1.msra.mxu0 0.0
    %213 = vmatprep.subr.mxu0 0.0
    %214 = vmatpush1.msra.mxu0 0.0
    %215 = vmatprep.subr.mxu0 0.0
    %216 = vmatpush1.msra.mxu0 0.0
    %217 = vmatprep.subr.mxu0 0.0
    %218 = vmatpush1.msra.mxu0 0.0
    %219 = vmatprep.subr.mxu0 0.0
    %220 = vmatpush1.msra.mxu0 0.0
    %221 = vmatprep.subr.mxu0 0.0
    %222 = vmatpush1.msra.mxu0 0.0
    %223 = vmatprep.subr.mxu0 0.0
    %224 = vmatpush1.msra.mxu0 0.0
    %225 = vmatprep.subr.mxu0 0.0
    %226 = vmatpush1.msra.mxu0 0.0
    %227 = vmatprep.subr.mxu0 0.0
    %228 = vmatpush1.msra.mxu0 0.0
    %229 = vmatprep.subr.mxu0 0.0
    %230 = vmatpush1.msra.mxu0 0.0
    %231 = vmatprep.subr.mxu0 0.0
    %232 = vmatpush1.msra.mxu0 0.0
    %233 = vmatprep.subr.mxu0 0.0
    %234 = vmatpush1.msra.mxu0 0.0
    %235 = vmatprep.subr.mxu0 0.0
    %236 = vmatpush1.msra.mxu0 0.0
    %237 = vmatprep.subr.mxu0 0.0
    %238 = vmatpush1.msra.mxu0 0.0
    %239 = vmatprep.subr.mxu0 0.0
    %240 = vmatpush1.msra.mxu0 0.0
    %241 = vmatprep.subr.mxu0 0.0
    %242 = vmatpush1.msra.mxu0 0.0
    %243 = vmatprep.subr.mxu0 0.0
    %244 = vmatpush1.msra.mxu0 0.0
    %245 = vmatprep.subr.mxu0 0.0
    %246 = vmatpush1.msra.mxu0 0.0
    %247 = vmatprep.subr.mxu0 0.0
    %248 = vmatpush1.msra.mxu0 0.0
    %249 = vmatprep.subr.mxu0 0.0
    %250 = vmatpush1.msra.mxu0 0.0
    %251 = vmatprep.subr.mxu0 0.0
    %252 = vmatpush1.msra.mxu0 0.0
    %253 = vmatprep.subr.mxu0 0.0
    %254 = vmatpush1.msra.mxu0 0.0
    %255 = vmatprep.subr.mxu0 0.0
    %256 = vmatpush1.msra.mxu0 0.0
    %257 = vmatprep.mubr.f32.mxu0 0.0
    %258 = vmatmul.mubr.f32.gmra.mrb[0].mxu0 %v191
    %v259 = vpop.f32.mrb[0].mxu0
    %v260 = vadd.f32 0.0, %v259
    %v261 = vpop.f32.mrb[0].mxu0
    %262 = vdwg.mxu0
    %vm263 = vcmask 523264
    %264 = vst.msk [vmem:[#allocation9] sm:$0xff] %vm263, %v260
    // Predicated region
    $region42: #{tpu_custom_call.1} parent=1 // pred_check
      _
    $region43: #{tpu_custom_call.1} parent=1 // pred_check_branch
      %266 = sbr.rel (0) target = $region45
    $region44: #{tpu_custom_call.1} parent=1 // pred_region
      %s268 = ssub.s32 128, 128
      %269 = vsyncadd [#allocation5], %s268
      %s271 = sshll.u32 [#allocation9], 4
      %s272 = int_to_ptr.vmem [resolvable:$true] %s271
      %274 = dma.vmem_to_hbm [thread:$0]  %s272, 128, %s6, [#allocation5]
    $region45: #{tpu_custom_call.1} parent=1 // pred_fallthru
      _
    // Predicated region
    $region46: #{tpu_custom_call.1} parent=1 // pred_check
      _
    $region47: #{tpu_custom_call.1} parent=1 // pred_check_branch
      %276 = sbr.rel (0) target = $region49
    $region48: #{tpu_custom_call.1} parent=1 // pred_region
      %277 = dma.done [#allocation5], 128
    $region49: #{tpu_custom_call.1} parent=1 // pred_fallthru
      _
    %278 = vsyncpa [#allocation4], 1
    %279 = vsyncpa [#allocation7], 1
    %280 = vsyncpa [#allocation5], 1

</llo_original>
